<compile_context>
chip_gen: v6e
topology: v6e:2x2x1
jax: 0.10.0
libtpu: 0.0.40
codegen_flags: <defaults>
</compile_context>

<pallas_src>
import jax
import jax.numpy as jnp
import numpy as np
from jax.experimental import pallas as pl
from jax.experimental.pallas import tpu as pltpu


def _cdiv(a, b):
    return -(-a // b)


# ----------------------------------------------------------------------------
# Fused Pallas kernel: relu(W2 @ relu(W1 @ x + b1) + b2) on a (Bt, C, TS) tile
# ----------------------------------------------------------------------------

def _green_block_kernel(x_ref, w1_ref, b1_ref, w2_ref, b2_ref, o_ref):
    # x_ref : (Bt, Cin, TS)   channels on sublanes, spatial on lanes
    # w1_ref: (Cin, Cin)      folded (BN1-scale * pointwise * depthwise) weights
    # b1_ref: (Cin, 1)        folded BN1 bias
    # w2_ref: (Cout, Cin)     folded (BN2-scale * conv) weights
    # b2_ref: (Cout, 1)       folded (BN2-scale * conv-bias + BN2-bias)
    # o_ref : (Bt, Cout, TS)
    w1 = w1_ref[...]
    b1 = b1_ref[...]
    w2 = w2_ref[...]
    b2 = b2_ref[...]
    for b in range(x_ref.shape[0]):            # static Bt, unrolled
        x = x_ref[b]
        y = jnp.dot(w1, x, preferred_element_type=jnp.float32)
        y = jnp.maximum(y + b1, 0.0)
        z = jnp.dot(w2, y, preferred_element_type=jnp.float32)
        o_ref[b] = jnp.maximum(z + b2, 0.0).astype(o_ref.dtype)


# ----------------------------------------------------------------------------
# Wrapper: tiling / VMEM sizing + pallas_call
# ----------------------------------------------------------------------------

def _vmem_limit_bytes():
    """Generation-aware scoped-VMEM request (v5e/v6e: 128 MiB phys, v7x: 64 MiB)."""
    try:
        cap = int(pltpu.get_tpu_info().vmem_capacity_bytes)
    except Exception:
        cap = 64 << 20        # conservative fallback = v7x per-TC capacity
    # Keep headroom for Mosaic internals; never request more than 96 MiB.
    return min(int(cap * 3) // 4, 96 << 20)


def green_block_forward(folded, x_nchw, *, max_spatial_tile=8192):
    """Runs GreenBlock forward. Input/output are NCHW like the PyTorch module."""
    w1, b1, w2, b2 = folded["w1"], folded["b1"], folded["w2"], folded["b2"]
    B, Cin, H, W = x_nchw.shape
    Cout = w2.shape[0]
    hw = H * W

    vmem_limit = _vmem_limit_bytes()

    # Rough f32 VMEM footprint model:
    #   weights (double-buffered even though constant-index): 2*(Cin^2 + Cout*Cin + Cin + Cout)
    #   per spatial column per batch element: double-buffered x (2*Cin) +
    #   double-buffered out (2*Cout) + intermediates/temporaries (~2*Cin + 2*Cout)
    weight_bytes = 4 * 2 * (Cin * Cin + Cout * Cin + Cin + Cout)
    per_col = 4 * (4 * Cin + 4 * Cout)
    budget = max(vmem_limit - weight_bytes - (2 << 20), per_col * 128)
    max_cols = max(128, budget // per_col)

    # Spatial tile: largest lane-aligned size the budget allows, capped.
    ts_cap = min(max_cols, max_spatial_tile)
    if hw <= ts_cap:
        ts = hw                                  # full extent -> no raggedness
    else:
        ts = max(128, (ts_cap // 128) * 128)     # lane-aligned tile, ragged tail masked
    ns = _cdiv(hw, ts)

    # Batch blocking: if the whole spatial extent fits one tile and B is large,
    # pack several batch elements per grid step (amortize per-step overhead),
    # keeping >= 2 grid steps for v7x's two TensorCores.
    bt = 1
    if ns == 1 and B > 2:
        bt = int(max(1, min(B // 2, ts_cap // max(hw, 1), 8)))
    nb = _cdiv(B, bt)

    # Guarantee >= 2 grid steps when the spatial axis can be split lane-aligned.
    if nb * ns < 2 and hw >= 256:
        half = ((hw + 1) // 2 + 127) // 128 * 128
        if half < hw:
            ts = half
            ns = _cdiv(hw, ts)

    x3 = x_nchw.reshape(B, Cin, hw)              # metadata-only reshape, no HBM copy

    out = pl.pallas_call(
        _green_block_kernel,
        out_shape=jax.ShapeDtypeStruct((B, Cout, hw), jnp.float32),
        grid=(nb, ns),
        in_specs=[
            pl.BlockSpec((bt, Cin, ts), lambda b, s: (b, 0, s)),
            pl.BlockSpec((Cin, Cin), lambda b, s: (0, 0)),
            pl.BlockSpec((Cin, 1), lambda b, s: (0, 0)),
            pl.BlockSpec((Cout, Cin), lambda b, s: (0, 0)),
            pl.BlockSpec((Cout, 1), lambda b, s: (0, 0)),
        ],
        out_specs=pl.BlockSpec((bt, Cout, ts), lambda b, s: (b, 0, s)),
        compiler_params=pltpu.CompilerParams(
            dimension_semantics=("parallel", "parallel"),
            vmem_limit_bytes=int(vmem_limit)),
    )(x3, w1, b1.reshape(Cin, 1), w2, b2.reshape(Cout, 1))

    return out.reshape(B, Cout, H, W)


# ----------------------------------------------------------------------------
# Parameter folding (inference-mode BN) + raw-parameter init
# ----------------------------------------------------------------------------

def fold_params(raw, eps=1e-5):
    # Layer 1: y = BN1(W_pw @ (dw * x)) -> W1_eff = s1 * W_pw * dw, b1_eff = sh1
    s1 = raw["gamma1"] / jnp.sqrt(raw["var1"] + eps)
    sh1 = raw["beta1"] - raw["mean1"] * s1
    w1 = s1[:, None] * raw["w_pw"] * raw["dw"][None, :]
    b1 = sh1
    # Layer 2: z = BN2(W_c @ y + b_c) -> W2_eff = s2 * W_c, b2_eff = s2*b_c + sh2
    s2 = raw["gamma2"] / jnp.sqrt(raw["var2"] + eps)
    sh2 = raw["beta2"] - raw["mean2"] * s2
    w2 = s2[:, None] * raw["w_conv"]
    b2 = s2 * raw["b_conv"] + sh2
    return dict(w1=w1.astype(jnp.float32), b1=b1.astype(jnp.float32),
                w2=w2.astype(jnp.float32), b2=b2.astype(jnp.float32))


def init_raw_params(key, cin, cout):
    ks = jax.random.split(key, 11)
    def bn(kg, kb, km, kv, c):
        gamma = 1.0 + 0.1 * jax.random.normal(kg, (c,), jnp.float32)
        beta = 0.1 * jax.random.normal(kb, (c,), jnp.float32)
        mean = 0.1 * jax.random.normal(km, (c,), jnp.float32)
        var = 0.5 + jnp.abs(jax.random.normal(kv, (c,), jnp.float32))
        return gamma, beta, mean, var
    g1, be1, m1, v1 = bn(ks[0], ks[1], ks[2], ks[3], cin)
    g2, be2, m2, v2 = bn(ks[4], ks[5], ks[6], ks[7], cout)
    return dict(
        dw=jax.random.normal(ks[8], (cin,), jnp.float32),                      # depthwise 1x1
        w_pw=jax.random.normal(ks[9], (cin, cin), jnp.float32) / np.sqrt(cin), # pointwise 1x1
        gamma1=g1, beta1=be1, mean1=m1, var1=v1,
        w_conv=jax.random.normal(ks[10], (cout, cin), jnp.float32) / np.sqrt(cin),
        b_conv=0.1 * jnp.arange(cout, dtype=jnp.float32),
        gamma2=g2, beta2=be2, mean2=m2, var2=v2,
    )


# ----------------------------------------------------------------------------
# Pure-JAX reference (unfused, mirrors the PyTorch ops step by step)
# ----------------------------------------------------------------------------

def green_block_ref(raw, x_nchw, eps=1e-5):
    hp = jax.lax.Precision.HIGHEST
    def bnorm(t, g, b, m, v):
        sh = (1, -1, 1, 1)
        return (t - m.reshape(sh)) / jnp.sqrt(v.reshape(sh) + eps) * g.reshape(sh) + b.reshape(sh)
    # SeparableConv2d(k=1): fixed_padding(k=1, rate=1) pads nothing.
    y = x_nchw * raw["dw"].reshape(1, -1, 1, 1)                      # depthwise 1x1, groups=Cin
    y = jnp.einsum("oi,bihw->bohw", raw["w_pw"], y, precision=hp)    # pointwise 1x1, bias=False
    y = jnp.maximum(bnorm(y, raw["gamma1"], raw["beta1"], raw["mean1"], raw["var1"]), 0.0)
    z = jnp.einsum("oi,bihw->bohw", raw["w_conv"], y, precision=hp)
    z = z + raw["b_conv"].reshape(1, -1, 1, 1)
    z = jnp.maximum(bnorm(z, raw["gamma2"], raw["beta2"], raw["mean2"], raw["var2"]), 0.0)
    return z


# ----------------------------------------------------------------------------
# Main
# ----------------------------------------------------------------------------

if __name__ == "__main__":
    key = jax.random.PRNGKey(0)
    kx, kp = jax.random.split(key)

    B, Cin, Cout, H, W = 2, 4, 8, 16, 16
    x = jax.random.normal(kx, (B, Cin, H, W), jnp.float32)
    raw = init_raw_params(kp, Cin, Cout)
    folded = fold_params(raw)

    out = green_block_forward(folded, x)
    out = jax.block_until_ready(out)
    assert out.shape == (B, Cout, H, W)

    ref = green_block_ref(raw, x)
    np.testing.assert_allclose(np.asarray(out), np.asarray(ref), rtol=1e-2, atol=1e-2)

    print("KERNEL_OK")
</pallas_src>

<mosaic_0001>
module attributes {stable_mosaic.version = 11 : i64} {
  func.func @_green_block_kernel(%arg0: i32, %arg1: i32, %arg2: memref<1x4x256xf32, #tpu.memory_space<vmem>>, %arg3: memref<4x4xf32, #tpu.memory_space<vmem>>, %arg4: memref<4x1xf32, #tpu.memory_space<vmem>>, %arg5: memref<8x4xf32, #tpu.memory_space<vmem>>, %arg6: memref<8x1xf32, #tpu.memory_space<vmem>>, %arg7: memref<1x8x256xf32, #tpu.memory_space<vmem>>) attributes {dimension_semantics = [#tpu.dimension_semantics<parallel>, #tpu.dimension_semantics<parallel>], iteration_bounds = array<i64: 2, 1>, scalar_prefetch = 0 : i64, scratch_operands = 0 : i64, tpu.core_type = #tpu.core_type<tc>, window_params = [{transform_indices = @transform_0, window_bounds = array<i64: 1, 4, 256>}, {pipeline_mode = #tpu.pipeline_mode<synchronous>, transform_indices = @transform_1, window_bounds = array<i64: 4, 4>}, {pipeline_mode = #tpu.pipeline_mode<synchronous>, transform_indices = @transform_2, window_bounds = array<i64: 4, 1>}, {pipeline_mode = #tpu.pipeline_mode<synchronous>, transform_indices = @transform_3, window_bounds = array<i64: 8, 4>}, {pipeline_mode = #tpu.pipeline_mode<synchronous>, transform_indices = @transform_4, window_bounds = array<i64: 8, 1>}, {transform_indices = @transform_5, window_bounds = array<i64: 1, 8, 256>}]} {
    %c0 = arith.constant 0 : index
    %c0_0 = arith.constant 0 : index
    %0 = vector.load %arg3[%c0, %c0_0] : memref<4x4xf32, #tpu.memory_space<vmem>>, vector<4x4xf32>
    %c0_1 = arith.constant 0 : index
    %c0_2 = arith.constant 0 : index
    %1 = vector.load %arg4[%c0_1, %c0_2] : memref<4x1xf32, #tpu.memory_space<vmem>>, vector<4x1xf32>
    %c0_3 = arith.constant 0 : index
    %c0_4 = arith.constant 0 : index
    %2 = vector.load %arg5[%c0_3, %c0_4] : memref<8x4xf32, #tpu.memory_space<vmem>>, vector<8x4xf32>
    %c0_5 = arith.constant 0 : index
    %c0_6 = arith.constant 0 : index
    %3 = vector.load %arg6[%c0_5, %c0_6] : memref<8x1xf32, #tpu.memory_space<vmem>>, vector<8x1xf32>
    %c0_7 = arith.constant 0 : index
    %c0_8 = arith.constant 0 : index
    %c0_9 = arith.constant 0 : index
    %4 = vector.load %arg2[%c0_7, %c0_8, %c0_9] : memref<1x4x256xf32, #tpu.memory_space<vmem>>, vector<1x4x256xf32>
    %5 = vector.shape_cast %4 : vector<1x4x256xf32> to vector<4x256xf32>
    %cst = arith.constant dense<0.000000e+00> : vector<4x256xf32>
    %6 = tpu.matmul %0, %5, %cst {dimension_numbers = #tpu.dot_dimension_numbers<[1], [0], [0], [1], [0, 0, 1, 1], [], []>} : vector<4x4xf32>, vector<4x256xf32>, vector<4x256xf32> -> vector<4x256xf32>
    %7 = vector.broadcast %1 : vector<4x1xf32> to vector<4x256xf32>
    %8 = arith.addf %6, %7 : vector<4x256xf32>
    %cst_10 = arith.constant 0.000000e+00 : f32
    %9 = vector.broadcast %cst_10 : f32 to vector<4x256xf32>
    %10 = arith.maximumf %8, %9 : vector<4x256xf32>
    %cst_11 = arith.constant dense<0.000000e+00> : vector<8x256xf32>
    %11 = tpu.matmul %2, %10, %cst_11 {dimension_numbers = #tpu.dot_dimension_numbers<[1], [0], [0], [1], [0, 0, 1, 1], [], []>} : vector<8x4xf32>, vector<4x256xf32>, vector<8x256xf32> -> vector<8x256xf32>
    %12 = vector.broadcast %3 : vector<8x1xf32> to vector<8x256xf32>
    %13 = arith.addf %11, %12 : vector<8x256xf32>
    %cst_12 = arith.constant 0.000000e+00 : f32
    %14 = vector.broadcast %cst_12 : f32 to vector<8x256xf32>
    %15 = arith.maximumf %13, %14 : vector<8x256xf32>
    %c0_13 = arith.constant 0 : index
    %c0_14 = arith.constant 0 : index
    %c0_15 = arith.constant 0 : index
    %16 = vector.load %arg7[%c0_13, %c0_14, %c0_15] : memref<1x8x256xf32, #tpu.memory_space<vmem>>, vector<1x8x256xf32>
    %17 = vector.shape_cast %16 : vector<1x8x256xf32> to vector<8x256xf32>
    %18 = vector.shape_cast %15 : vector<8x256xf32> to vector<1x8x256xf32>
    tpu.vector_store %arg7[%c0_13, %c0_14, %c0_15], %18 {strides = array<i32>} : memref<1x8x256xf32, #tpu.memory_space<vmem>>, vector<1x8x256xf32>,
    return
  }
  func.func @transform_0(%arg0: i32, %arg1: i32) -> (i32, i32, i32) {
    %c0_i32 = arith.constant 0 : i32
    %c0_i32_0 = arith.constant 0 : i32
    return %arg0, %c0_i32, %arg1 : i32, i32, i32
  }
  func.func @transform_1(%arg0: i32, %arg1: i32) -> (i32, i32) {
    %c0_i32 = arith.constant 0 : i32
    %c0_i32_0 = arith.constant 0 : i32
    %c0_i32_1 = arith.constant 0 : i32
    return %c0_i32, %c0_i32_0 : i32, i32
  }
  func.func @transform_2(%arg0: i32, %arg1: i32) -> (i32, i32) {
    %c0_i32 = arith.constant 0 : i32
    %c0_i32_0 = arith.constant 0 : i32
    %c0_i32_1 = arith.constant 0 : i32
    return %c0_i32, %c0_i32_0 : i32, i32
  }
  func.func @transform_3(%arg0: i32, %arg1: i32) -> (i32, i32) {
    %c0_i32 = arith.constant 0 : i32
    %c0_i32_0 = arith.constant 0 : i32
    %c0_i32_1 = arith.constant 0 : i32
    return %c0_i32, %c0_i32_0 : i32, i32
  }
  func.func @transform_4(%arg0: i32, %arg1: i32) -> (i32, i32) {
    %c0_i32 = arith.constant 0 : i32
    %c0_i32_0 = arith.constant 0 : i32
    %c0_i32_1 = arith.constant 0 : i32
    return %c0_i32, %c0_i32_0 : i32, i32
  }
  func.func @transform_5(%arg0: i32, %arg1: i32) -> (i32, i32, i32) {
    %c0_i32 = arith.constant 0 : i32
    %c0_i32_0 = arith.constant 0 : i32
    return %arg0, %c0_i32, %arg1 : i32, i32, i32
  }
}

</mosaic_0001>

<llo_original>
// kernel: tpu_custom_call.1
$region0: #{tpu_custom_call.1}
  #allocation0 [shape = 'u32[]', space=smem, size = 0x4, offset = 0x4, fixed_abs, tag = 'smem constant byte address 0x4 - core index']
  #allocation1 [shape = 'u32[144,128]{1,0:T(1,128)}', space=vmem, size = 0x12000, scoped, tag = 'internal scratch']
  %s0 = inlined_call_operand.vmem [shape: f32[2,4,256], index: 0, kind: input, shape index: {}]
  %s1 = inlined_call_operand.vmem [shape: f32[4,4], index: 1, kind: input, shape index: {}]
  %s2 = inlined_call_operand.vmem [shape: f32[4,1], index: 2, kind: input, shape index: {}]
  %s3 = inlined_call_operand.vmem [shape: f32[8,4], index: 3, kind: input, shape index: {}]
  %s4 = inlined_call_operand.vmem [shape: f32[8,1], index: 4, kind: input, shape index: {}]
  %s5 = inlined_call_operand.hbm [shape: f32[2,8,256], index: 5, kind: output, shape index: {}]
  %s6 = sld [smem:[#allocation0]]
  $region53: #{tpu_custom_call.1} parent=0
    _
  %s8 = ssub.s32 1, %s6
  %s9 = scalar_select 0, %s8, %s6
  $region1: #{tpu_custom_call.1} parent=0
    #allocation2 [shape = 'u8[16384]{0}', space=vmem, size = 0x4000, scoped, tag = 'output window, operand 0']
    #allocation3 [shape = 's32[2]{0}', space=sflag, size = 0x8, scoped, tag = 'scoped memory for tpu_custom_call.1']
    %10 = vsyncpa [#allocation3], 0
    %s11 = scalar_lea.sflag [#allocation3], 1
    %12 = vsyncpa %s11, 0
    loop: start=0, step=1, limit=4
    $region2: #{tpu_custom_call.1} parent=1 // loop_pre_header
      _
    $region3: #{tpu_custom_call.1} parent=1 // loop_header
      %s14 = sphi 0, %s18
      %p15 = scmp.ge.s32.totalorder %s14, 4
      %s21 = sphi 0, %s33
      %s22 = sphi 0, %s29
      %s23 = sphi 0, %s21
      %s24 = sphi 0, %s22
      %s25 = sphi 0, %s23
      %s26 = sphi 0, %s24
      %s38 = sphi 0, %s40
      %s41 = sphi 0, %s38
      %s42 = sphi 0, %s41
      %s58 = sphi 0, %s42
      %s62 = sphi 0, %s62
      %s64 = sphi 0, %s62
      %s65 = sphi 0, %s64
      %s79 = sphi 0, %s65
      %s83 = sphi 0, %s83
      %s85 = sphi 0, %s83
      %s86 = sphi 0, %s85
      %s100 = sphi 0, %s86
      %s104 = sphi 0, %s104
      %s106 = sphi 0, %s104
      %s107 = sphi 0, %s106
      %s121 = sphi 0, %s107
      %s125 = sphi 0, %s125
      %s127 = sphi 0, %s125
      %s128 = sphi 0, %s127
      %s142 = sphi 0, %s128
      %s150 = sphi 0, %s152
      %s153 = sphi 0, %s150
      %s154 = sphi 0, %s153
      %s170 = sphi 0, %s154
    $region4: #{tpu_custom_call.1} parent=1 // loop_header_branch
      %17 = sbr.rel (%p15) target = $region8
    $region5: #{tpu_custom_call.1} parent=1 // loop_body
      %s19 = ssub.s32 %s14, 1
      %s20 = ssub.s32 %s14, 2
      %s27 = sadd.s32 1, %s22
      %p28 = scmp.ge.s32.totalorder %s27, 1
      %s29 = scalar_select %p28, 0, %s27
      %s30 = sadd.s32 1, %s21
      %s31 = scalar_select %p28, %s30, %s21
      %p32 = scmp.ge.s32.totalorder %s31, 2
      %s33 = scalar_select %p32, 0, %s31
      %s34 = ssub.s32 %s21, %s33
      %s35 = ssub.s32 %s22, %s29
      %s36 = sor.u32 %s34, %s35
      %p37 = scmp.eq.s32.totalorder %s36, 0
      %s39 = sadd.s32 %s38, 1
      %s40 = scalar_select %p37, %s38, %s39
      %p43 = pneg %p37
      %p44 = scmp.eq.s32.totalorder %s14, 1
      %p45 = por %p43, %p44
      %p46 = scmp.ne.s32.totalorder %s38, %s41
      %p47 = scmp.eq.s32.totalorder %s14, 0
      %p48 = por %p46, %p47
      %p49 = scmp.ne.s32.totalorder %s38, %s41
      %p50 = scmp.eq.s32.totalorder %s19, 1
      %p51 = por %p49, %p50
      %p52 = scmp.ne.s32.totalorder %s41, %s42
      %p53 = scmp.eq.s32.totalorder %s19, 0
      %p54 = por %p52, %p53
      %p55 = scmp.ne.s32.totalorder %s41, %s42
      %p56 = scmp.eq.s32.totalorder %s20, 1
      %p57 = por %p55, %p56
      %p59 = scmp.ne.s32.totalorder %s42, %s58
      %p60 = scmp.eq.s32.totalorder %s20, 0
      %p61 = por %p59, %p60
      %s63 = sadd.s32 %s62, 1
      %p66 = scmp.eq.s32.totalorder %s14, 1
      %p67 = scmp.ne.s32.totalorder %s62, %s64
      %p68 = scmp.eq.s32.totalorder %s14, 0
      %p69 = por %p67, %p68
      %p70 = scmp.ne.s32.totalorder %s62, %s64
      %p71 = scmp.eq.s32.totalorder %s19, 1
      %p72 = por %p70, %p71
      %p73 = scmp.ne.s32.totalorder %s64, %s65
      %p74 = scmp.eq.s32.totalorder %s19, 0
      %p75 = por %p73, %p74
      %p76 = scmp.ne.s32.totalorder %s64, %s65
      %p77 = scmp.eq.s32.totalorder %s20, 1
      %p78 = por %p76, %p77
      %p80 = scmp.ne.s32.totalorder %s65, %s79
      %p81 = scmp.eq.s32.totalorder %s20, 0
      %p82 = por %p80, %p81
      %s84 = sadd.s32 %s83, 1
      %p87 = scmp.eq.s32.totalorder %s14, 1
      %p88 = scmp.ne.s32.totalorder %s83, %s85
      %p89 = scmp.eq.s32.totalorder %s14, 0
      %p90 = por %p88, %p89
      %p91 = scmp.ne.s32.totalorder %s83, %s85
      %p92 = scmp.eq.s32.totalorder %s19, 1
      %p93 = por %p91, %p92
      %p94 = scmp.ne.s32.totalorder %s85, %s86
      %p95 = scmp.eq.s32.totalorder %s19, 0
      %p96 = por %p94, %p95
      %p97 = scmp.ne.s32.totalorder %s85, %s86
      %p98 = scmp.eq.s32.totalorder %s20, 1
      %p99 = por %p97, %p98
      %p101 = scmp.ne.s32.totalorder %s86, %s100
      %p102 = scmp.eq.s32.totalorder %s20, 0
      %p103 = por %p101, %p102
      %s105 = sadd.s32 %s104, 1
      %p108 = scmp.eq.s32.totalorder %s14, 1
      %p109 = scmp.ne.s32.totalorder %s104, %s106
      %p110 = scmp.eq.s32.totalorder %s14, 0
      %p111 = por %p109, %p110
      %p112 = scmp.ne.s32.totalorder %s104, %s106
      %p113 = scmp.eq.s32.totalorder %s19, 1
      %p114 = por %p112, %p113
      %p115 = scmp.ne.s32.totalorder %s106, %s107
      %p116 = scmp.eq.s32.totalorder %s19, 0
      %p117 = por %p115, %p116
      %p118 = scmp.ne.s32.totalorder %s106, %s107
      %p119 = scmp.eq.s32.totalorder %s20, 1
      %p120 = por %p118, %p119
      %p122 = scmp.ne.s32.totalorder %s107, %s121
      %p123 = scmp.eq.s32.totalorder %s20, 0
      %p124 = por %p122, %p123
      %s126 = sadd.s32 %s125, 1
      %p129 = scmp.eq.s32.totalorder %s14, 1
      %p130 = scmp.ne.s32.totalorder %s125, %s127
      %p131 = scmp.eq.s32.totalorder %s14, 0
      %p132 = por %p130, %p131
      %p133 = scmp.ne.s32.totalorder %s125, %s127
      %p134 = scmp.eq.s32.totalorder %s19, 1
      %p135 = por %p133, %p134
      %p136 = scmp.ne.s32.totalorder %s127, %s128
      %p137 = scmp.eq.s32.totalorder %s19, 0
      %p138 = por %p136, %p137
      %p139 = scmp.ne.s32.totalorder %s127, %s128
      %p140 = scmp.eq.s32.totalorder %s20, 1
      %p141 = por %p139, %p140
      %p143 = scmp.ne.s32.totalorder %s128, %s142
      %p144 = scmp.eq.s32.totalorder %s20, 0
      %p145 = por %p143, %p144
      %s146 = ssub.s32 %s21, %s33
      %s147 = ssub.s32 %s22, %s29
      %s148 = sor.u32 %s146, %s147
      %p149 = scmp.eq.s32.totalorder %s148, 0
      %s151 = sadd.s32 %s150, 1
      %s152 = scalar_select %p149, %s150, %s151
      %p155 = pneg %p149
      %p156 = scmp.eq.s32.totalorder %s14, 1
      %p157 = por %p155, %p156
      %p158 = scmp.ne.s32.totalorder %s150, %s153
      %p159 = scmp.eq.s32.totalorder %s14, 0
      %p160 = por %p158, %p159
      %p161 = scmp.ne.s32.totalorder %s150, %s153
      %p162 = scmp.eq.s32.totalorder %s19, 1
      %p163 = por %p161, %p162
      %p164 = scmp.ne.s32.totalorder %s153, %s154
      %p165 = scmp.eq.s32.totalorder %s19, 0
      %p166 = por %p164, %p165
      %p167 = scmp.ne.s32.totalorder %s153, %s154
      %p168 = scmp.eq.s32.totalorder %s20, 1
      %p169 = por %p167, %p168
      %p171 = scmp.ne.s32.totalorder %s154, %s170
      %p172 = scmp.eq.s32.totalorder %s20, 0
      %p173 = por %p171, %p172
      %p174 = scmp.le.s32.totalorder 1, %s14
      %p175 = scmp.lt.s32.totalorder %s14, 3
      %p176 = pnand %p174, %p175
      %p177 = pneg %p176
      // Predicated region
      $region9: #{tpu_custom_call.1} parent=5 // pred_check
        _
      $region10: #{tpu_custom_call.1} parent=5 // pred_check_branch
        %179 = sbr.rel (%p176) target = $region12
      $region11: #{tpu_custom_call.1} parent=5 // pred_region
        %s180 = ssub.s32 %s14, 1
        // Predicated region
        $region13: #{tpu_custom_call.1} parent=11 // pred_check
          %p181 = pneg %p75
        $region14: #{tpu_custom_call.1} parent=11 // pred_check_branch
          %183 = sbr.rel (%p181) target = $region16
        $region15: #{tpu_custom_call.1} parent=11 // pred_region
          _
        $region16: #{tpu_custom_call.1} parent=11 // pred_fallthru
          _
        // Predicated region
        $region17: #{tpu_custom_call.1} parent=11 // pred_check
          %p184 = pneg %p96
        $region18: #{tpu_custom_call.1} parent=11 // pred_check_branch
          %186 = sbr.rel (%p184) target = $region20
        $region19: #{tpu_custom_call.1} parent=11 // pred_region
          _
        $region20: #{tpu_custom_call.1} parent=11 // pred_fallthru
          _
        // Predicated region
        $region21: #{tpu_custom_call.1} parent=11 // pred_check
          %p187 = pneg %p117
        $region22: #{tpu_custom_call.1} parent=11 // pred_check_branch
          %189 = sbr.rel (%p187) target = $region24
        $region23: #{tpu_custom_call.1} parent=11 // pred_region
          _
        $region24: #{tpu_custom_call.1} parent=11 // pred_fallthru
          _
        // Predicated region
        $region25: #{tpu_custom_call.1} parent=11 // pred_check
          %p190 = pneg %p138
        $region26: #{tpu_custom_call.1} parent=11 // pred_check_branch
          %192 = sbr.rel (%p190) target = $region28
        $region27: #{tpu_custom_call.1} parent=11 // pred_region
          _
        $region28: #{tpu_custom_call.1} parent=11 // pred_fallthru
          _
      $region12: #{tpu_custom_call.1} parent=5 // pred_fallthru
        _
      %p193 = scmp.lt.s32.totalorder %s14, 2
      // Predicated region
      $region29: #{tpu_custom_call.1} parent=5 // pred_check
        %p194 = pneg %p193
      $region30: #{tpu_custom_call.1} parent=5 // pred_check_branch
        %196 = sbr.rel (%p194) target = $region32
      $region31: #{tpu_custom_call.1} parent=5 // pred_region
        // Predicated region
        $region33: #{tpu_custom_call.1} parent=31 // pred_check
          %p197 = pneg %p48
        $region34: #{tpu_custom_call.1} parent=31 // pred_check_branch
          %199 = sbr.rel (%p197) target = $region36
        $region35: #{tpu_custom_call.1} parent=31 // pred_region
          %s200 = smul.u32 2, %s22
          %p201 = scmp.lt.s32.totalorder %s21, 1
          %s202 = scalar_select %p201, %s21, 1
          %p203 = scmp.lt.s32.totalorder %s200, 1
          %s204 = scalar_select %p203, %s200, 1
          %s205 = smul.addr %s202, 2
          %s206 = sadd.s32 %s204, %s205
          %s207 = smul.addr %s206, 4
          %s208 = scalar_lea.vmem %s0, %s207
          %s209 = smul.u32 2, %s22
        $region36: #{tpu_custom_call.1} parent=31 // pred_fallthru
          _
      $region32: #{tpu_custom_call.1} parent=5 // pred_fallthru
        _
      %p210 = scmp.le.s32.totalorder 1, %s14
      %p211 = scmp.lt.s32.totalorder %s14, 3
      %p212 = pnand %p210, %p211
      %p213 = pneg %p212
      // Predicated region
      $region37: #{tpu_custom_call.1} parent=5 // pred_check
        _
      $region38: #{tpu_custom_call.1} parent=5 // pred_check_branch
        %215 = sbr.rel (%p212) target = $region40
      $region39: #{tpu_custom_call.1} parent=5 // pred_region
        %s216 = ssub.s32 %s14, 1
        %s217 = smul.u32 2, %s24
        %p218 = scmp.lt.s32.totalorder %s23, 1
        %s219 = scalar_select %p218, %s23, 1
        %p220 = scmp.lt.s32.totalorder %s217, 1
        %s221 = scalar_select %p220, %s217, 1
        %s222 = smul.addr %s219, 2
        %s223 = sadd.s32 %s221, %s222
        %s224 = smul.addr %s223, 4
        %s225 = scalar_lea.vmem %s0, %s224
        %p226 = pneg %p54
        %p227 = pneg %p51
        %p228 = pneg %p75
        %p229 = pneg %p72
        %p230 = pneg %p96
        %p231 = pneg %p93
        %p232 = pneg %p117
        %p233 = pneg %p114
        %p234 = pneg %p138
        %p235 = pneg %p135
        %p236 = pneg %p166
        %p237 = pneg %p163
        %s238 = sand.u32 %s153, 1
        %s239 = scalar_lea.sflag [#allocation3], %s238
        %s240 = sand.u32 %s153, 1
        %s241 = smul.addr %s240, 16
        %s242 = scalar_lea.vmem [#allocation2], %s241
        %s243 = smul.u32 2, %s24
        %p244 = scmp.lt.s32.totalorder %s23, 1
        %s245 = scalar_select %p244, %s23, 1
        %p246 = scmp.lt.s32.totalorder %s243, 1
        %s247 = scalar_select %p246, %s243, 1
        %s248 = smul.addr %s245, 2
        %s249 = sadd.s32 %s247, %s248
        %s250 = smul.addr %s249, 4
        %s251 = scalar_lea.vmem %s0, %s250
        %s252 = smul.u32 2, %s24
        %s253 = smul.u32 2, %s24
        %v254 = vld [vmem:[%s1] sm:$0xf]
        %v255 = vld [vmem:[%s2] sm:$0xf]
        %v256 = vld [vmem:[%s3] sm:$0xff]
        %v257 = vld [vmem:[%s4] sm:$0xff]
        %v258 = vld [vmem:[%s251] sm:$0xff]
        %260 = vset.pattern.permute.xlu0 0
        %261 = vperm.xlu0 %260, %v255
        %v262 = vpop.permute.xlu0 %261
        %v265 = vcombine.high %v258, %v258
        %vm266 = vcmask 31744
        %v268 = vsel %vm266, %v254, 0
        %vm270 = vcmask 1043456
        %v271 = vsel %vm270, %v258, 0
        %v273 = vsel %vm270, %v265, 0
        %275 = vmatprep.subr.mxu0 0.0
        %276 = vmatpush1.msra.mxu0 0.0
        %277 = vmatprep.subr.mxu0 0.0
        %278 = vmatpush1.msra.mxu0 0.0
        %279 = vmatprep.subr.mxu0 0.0
        %280 = vmatpush1.msra.mxu0 0.0
        %281 = vmatprep.subr.mxu0 0.0
        %282 = vmatpush1.msra.mxu0 0.0
        %283 = vmatprep.subr.mxu0 0.0
        %284 = vmatpush1.msra.mxu0 0.0
        %285 = vmatprep.subr.mxu0 0.0
        %286 = vmatpush1.msra.mxu0 0.0
        %287 = vmatprep.subr.mxu0 0.0
        %288 = vmatpush1.msra.mxu0 0.0
        %289 = vmatprep.subr.mxu0 0.0
        %290 = vmatpush1.msra.mxu0 0.0
        %291 = vmatprep.subr.mxu0 0.0
        %292 = vmatpush1.msra.mxu0 0.0
        %293 = vmatprep.subr.mxu0 0.0
        %294 = vmatpush1.msra.mxu0 0.0
        %295 = vmatprep.subr.mxu0 0.0
        %296 = vmatpush1.msra.mxu0 0.0
        %297 = vmatprep.subr.mxu0 0.0
        %298 = vmatpush1.msra.mxu0 0.0
        %299 = vmatprep.subr.mxu0 0.0
        %300 = vmatpush1.msra.mxu0 0.0
        %301 = vmatprep.subr.mxu0 0.0
        %302 = vmatpush1.msra.mxu0 0.0
        %303 = vmatprep.subr.mxu0 0.0
        %304 = vmatpush1.msra.mxu0 0.0
        %305 = vmatprep.subr.mxu0 %v273
        %306 = vmatpush1.msra.mxu0 %v271
        %307 = vmatprep.subr.mxu0 0.0
        %308 = vmatpush2.msra.mxu0 0.0
        %309 = vmatprep.subr.mxu0 0.0
        %310 = vmatpush2.msra.mxu0 0.0
        %311 = vmatprep.subr.mxu0 0.0
        %312 = vmatpush2.msra.mxu0 0.0
        %313 = vmatprep.subr.mxu0 0.0
        %314 = vmatpush2.msra.mxu0 0.0
        %315 = vmatprep.subr.mxu0 0.0
        %316 = vmatpush2.msra.mxu0 0.0
        %317 = vmatprep.subr.mxu0 0.0
        %318 = vmatpush2.msra.mxu0 0.0
        %319 = vmatprep.subr.mxu0 0.0
        %320 = vmatpush2.msra.mxu0 0.0
        %321 = vmatprep.subr.mxu0 0.0
        %322 = vmatpush2.msra.mxu0 0.0
        %323 = vmatprep.subr.mxu0 0.0
        %324 = vmatpush2.msra.mxu0 0.0
        %325 = vmatprep.subr.mxu0 0.0
        %326 = vmatpush2.msra.mxu0 0.0
        %327 = vmatprep.subr.mxu0 0.0
        %328 = vmatpush2.msra.mxu0 0.0
        %329 = vmatprep.subr.mxu0 0.0
        %330 = vmatpush2.msra.mxu0 0.0
        %331 = vmatprep.subr.mxu0 0.0
        %332 = vmatpush2.msra.mxu0 0.0
        %333 = vmatprep.subr.mxu0 0.0
        %334 = vmatpush2.msra.mxu0 0.0
        %335 = vmatprep.subr.mxu0 0.0
        %336 = vmatpush2.msra.mxu0 0.0
        %337 = vmatprep.subr.mxu0 0.0
        %338 = vmatpush2.msra.mxu0 0.0
        %339 = vmatprep.mubr.f32.mxu0 0.0
        %340 = vmatmul.mubr.f32.gmra.mxu0 %v268
        %v341 = vpop.f32.mrf.mxu0
        %v342 = vadd.f32 %v262, %v341
        %v343 = vpop.f32.mrf.mxu0
        %v344 = vadd.f32 %v262, %v343
        %345 = vdwg.mxu0
        %v346 = vmax.f32 %v342, 0.0
        %v347 = vmax.f32 %v344, 0.0
        %349 = vset.pattern.permute.xlu0 0
        %350 = vperm.xlu0 %349, %v257
        %v351 = vpop.permute.xlu0 %350
        %v354 = vsel %vm266, %v256, 0
        %v357 = vsel %vm270, %v346, 0
        %v360 = vsel %vm270, %v347, 0
        %362 = vmatprep.subr.mxu0 0.0
        %363 = vmatpush1.msra.mxu0 0.0
        %364 = vmatprep.subr.mxu0 0.0
        %365 = vmatpush1.msra.mxu0 0.0
        %366 = vmatprep.subr.mxu0 0.0
        %367 = vmatpush1.msra.mxu0 0.0
        %368 = vmatprep.subr.mxu0 0.0
        %369 = vmatpush1.msra.mxu0 0.0
        %370 = vmatprep.subr.mxu0 0.0
        %371 = vmatpush1.msra.mxu0 0.0
        %372 = vmatprep.subr.mxu0 0.0
        %373 = vmatpush1.msra.mxu0 0.0
        %374 = vmatprep.subr.mxu0 0.0
        %375 = vmatpush1.msra.mxu0 0.0
        %376 = vmatprep.subr.mxu0 0.0
        %377 = vmatpush1.msra.mxu0 0.0
        %378 = vmatprep.subr.mxu0 0.0
        %379 = vmatpush1.msra.mxu0 0.0
        %380 = vmatprep.subr.mxu0 0.0
        %381 = vmatpush1.msra.mxu0 0.0
        %382 = vmatprep.subr.mxu0 0.0
        %383 = vmatpush1.msra.mxu0 0.0
        %384 = vmatprep.subr.mxu0 0.0
        %385 = vmatpush1.msra.mxu0 0.0
        %386 = vmatprep.subr.mxu0 0.0
        %387 = vmatpush1.msra.mxu0 0.0
        %388 = vmatprep.subr.mxu0 0.0
        %389 = vmatpush1.msra.mxu0 0.0
        %390 = vmatprep.subr.mxu0 0.0
        %391 = vmatpush1.msra.mxu0 0.0
        %392 = vmatprep.subr.mxu0 %v360
        %393 = vmatpush1.msra.mxu0 %v357
        %394 = vmatprep.subr.mxu0 0.0
        %395 = vmatpush2.msra.mxu0 0.0
        %396 = vmatprep.subr.mxu0 0.0
        %397 = vmatpush2.msra.mxu0 0.0
        %398 = vmatprep.subr.mxu0 0.0
        %399 = vmatpush2.msra.mxu0 0.0
        %400 = vmatprep.subr.mxu0 0.0
        %401 = vmatpush2.msra.mxu0 0.0
        %402 = vmatprep.subr.mxu0 0.0
        %403 = vmatpush2.msra.mxu0 0.0
        %404 = vmatprep.subr.mxu0 0.0
        %405 = vmatpush2.msra.mxu0 0.0
        %406 = vmatprep.subr.mxu0 0.0
        %407 = vmatpush2.msra.mxu0 0.0
        %408 = vmatprep.subr.mxu0 0.0
        %409 = vmatpush2.msra.mxu0 0.0
        %410 = vmatprep.subr.mxu0 0.0
        %411 = vmatpush2.msra.mxu0 0.0
        %412 = vmatprep.subr.mxu0 0.0
        %413 = vmatpush2.msra.mxu0 0.0
        %414 = vmatprep.subr.mxu0 0.0
        %415 = vmatpush2.msra.mxu0 0.0
        %416 = vmatprep.subr.mxu0 0.0
        %417 = vmatpush2.msra.mxu0 0.0
        %418 = vmatprep.subr.mxu0 0.0
        %419 = vmatpush2.msra.mxu0 0.0
        %420 = vmatprep.subr.mxu0 0.0
        %421 = vmatpush2.msra.mxu0 0.0
        %422 = vmatprep.subr.mxu0 0.0
        %423 = vmatpush2.msra.mxu0 0.0
        %424 = vmatprep.subr.mxu0 0.0
        %425 = vmatpush2.msra.mxu0 0.0
        %426 = vmatprep.mubr.f32.mxu0 0.0
        %427 = vmatmul.mubr.f32.gmra.mxu0 %v354
        %v428 = vpop.f32.mrf.mxu0
        %v429 = vadd.f32 %v351, %v428
        %v430 = vpop.f32.mrf.mxu0
        %v431 = vadd.f32 %v351, %v430
        %432 = vdwg.mxu0
        %v433 = vmax.f32 %v429, 0.0
        %v434 = vmax.f32 %v431, 0.0
        %435 = vst [vmem:[%s242] sm:$0xff] %v433
        %436 = vst [vmem:[%s242 + $0x8] sm:$0xff] %v434
        %s437 = sand.u32 %s153, 1
        %s438 = scalar_lea.sflag [#allocation3], %s437
        %s439 = sand.u32 %s153, 1
        %s440 = smul.addr %s439, 16
        %s441 = scalar_lea.vmem [#allocation2], %s440
        // Predicated region
        $region41: #{tpu_custom_call.1} parent=39 // pred_check
          %p442 = pneg %p163
        $region42: #{tpu_custom_call.1} parent=39 // pred_check_branch
          %444 = sbr.rel (%p442) target = $region44
        $region43: #{tpu_custom_call.1} parent=39 // pred_region
          %s445 = smul.u32 2, %s24
          %s447 = ssub.s32 256, 256
          %448 = vsyncadd %s438, %s447
          %s449 = smul.addr %s23, 2
          %s450 = sadd.s32 %s445, %s449
          %s451 = smul.addr %s450, 128
          %s452 = scalar_lea.hbm %s5, %s451
          %s454 = sshll.u32 %s441, 4
          %s455 = int_to_ptr.vmem [resolvable:$true] %s454
          %457 = dma.vmem_to_hbm [thread:$0]  %s455, 256, %s452, %s438
        $region44: #{tpu_custom_call.1} parent=39 // pred_fallthru
          _
      $region40: #{tpu_custom_call.1} parent=5 // pred_fallthru
        _
      %p458 = scmp.le.s32.totalorder 2, %s14
      // Predicated region
      $region45: #{tpu_custom_call.1} parent=5 // pred_check
        %p459 = pneg %p458
      $region46: #{tpu_custom_call.1} parent=5 // pred_check_branch
        %461 = sbr.rel (%p459) target = $region48
      $region47: #{tpu_custom_call.1} parent=5 // pred_region
        %s462 = ssub.s32 %s14, 2
        // Predicated region
        $region49: #{tpu_custom_call.1} parent=47 // pred_check
          %p463 = pneg %p169
        $region50: #{tpu_custom_call.1} parent=47 // pred_check_branch
          %465 = sbr.rel (%p463) target = $region52
        $region51: #{tpu_custom_call.1} parent=47 // pred_region
          %s466 = sand.u32 %s154, 1
          %s467 = scalar_lea.sflag [#allocation3], %s466
          %s468 = sand.u32 %s154, 1
          %s469 = smul.addr %s468, 16
          %s470 = scalar_lea.vmem [#allocation2], %s469
          %471 = dma.done %s467, 256
        $region52: #{tpu_custom_call.1} parent=47 // pred_fallthru
          _
      $region48: #{tpu_custom_call.1} parent=5 // pred_fallthru
        _
    $region6: #{tpu_custom_call.1} parent=1 // loop_footer
      %s18 = sadd.s32 1, %s14
    $region7: #{tpu_custom_call.1} parent=1 // loop_footer_branch
      %13 = sbr.rel target = $region3
    $region8: #{tpu_custom_call.1} parent=1 // loop_exit
      _
    %472 = vsyncpa [#allocation3], 1
    %s473 = scalar_lea.sflag [#allocation3], 1
    %474 = vsyncpa %s473, 1

</llo_original>
